<compile_context>
chip_gen: v5e
topology: v5e:2x2
jax: 0.10.0
libtpu: 0.0.40
codegen_flags: <defaults>
</compile_context>

<pallas_src>
import jax
import jax.numpy as jnp
from jax.experimental import pallas as pl
from jax.experimental.pallas import tpu as pltpu


def _round_up(x, m):
    return ((x + m - 1) // m) * m


def _sigmoid(x):
    # sigmoid(x) == 0.5 * (tanh(x / 2) + 1): keeps the transcendental on the
    # EUP slot and avoids a full-precision VALU divide.
    return 0.5 * jnp.tanh(0.5 * x) + 0.5


def classifier_kernel(x_ref, w_ih_ref, b_ih_ref, w_out_ref, b_out_ref, out_ref):
    # x: (TB, EP), w_ih: (EP, 3*HP) gate order [i, g, o], b_ih: (1, 3*HP)
    # w_out: (HP, CP), b_out: (1, CP), out: (TB, CP)
    hp = w_out_ref.shape[0]

    gates = (jnp.dot(x_ref[...], w_ih_ref[...],
                     preferred_element_type=jnp.float32)
             + b_ih_ref[...])                               # (TB, 3*HP)

    # Gate slices start on 128-lane boundaries (HP is a multiple of 128).
    i_g = _sigmoid(gates[:, 0 * hp:1 * hp])
    g_g = jnp.tanh(gates[:, 1 * hp:2 * hp])
    o_g = _sigmoid(gates[:, 2 * hp:3 * hp])

    c1 = i_g * g_g                       # f-gate term is identically zero (c0 == 0)
    h1 = o_g * jnp.tanh(c1)              # (TB, HP); padded lanes are exactly 0

    logits = (jnp.dot(h1, w_out_ref[...], preferred_element_type=jnp.float32)
              + b_out_ref[...])          # (TB, CP); padded classes get -1e30

    # LogSoftmax over the class dim (padded classes underflow to exp(.) == 0).
    m = jnp.max(logits, axis=-1, keepdims=True)
    shifted = logits - m
    lse = jnp.log(jnp.sum(jnp.exp(shifted), axis=-1, keepdims=True))
    out_ref[...] = shifted - lse


def prepare_params(w_ih_pt, b_ih, b_hh, w_out_pt, b_out):
    """Convert PyTorch-shaped params into the padded kernel layout.

    PyTorch shapes:
      w_ih_pt : (4H, E)  gate order [i, f, g, o]   (weight_ih_l0)
      b_ih    : (4H,)    b_hh : (4H,)
      w_out_pt: (C, H)   b_out: (C,)
    (weight_hh_l0 is not needed: h0 == 0 for a single step.)

    Returns:
      w_ih3 : (EP, 3*HP)  gate order [i, g, o], zero padded, E/H padded to 128
      bias3 : (1, 3*HP)   b_ih + b_hh folded, same layout
      w_out : (HP, CP)    zero padded
      b_outp: (1, CP)     real classes keep their bias, padded classes -> -1e30
    """
    four_h, e = w_ih_pt.shape
    h = four_h // 4
    c = w_out_pt.shape[0]
    ep, hp, cp = _round_up(e, 128), _round_up(h, 128), _round_up(c, 128)

    bias = b_ih + b_hh                    # fold once, at prep time
    gate_order = (0, 2, 3)                # keep [i, g, o]; drop the dead f gate

    w_ih3 = jnp.zeros((ep, 3 * hp), jnp.float32)
    bias3 = jnp.zeros((1, 3 * hp), jnp.float32)
    for slot, g in enumerate(gate_order):
        w_ih3 = w_ih3.at[:e, slot * hp:slot * hp + h].set(
            w_ih_pt[g * h:(g + 1) * h, :].T.astype(jnp.float32))
        bias3 = bias3.at[:, slot * hp:slot * hp + h].set(
            bias[g * h:(g + 1) * h].astype(jnp.float32))

    w_out = jnp.zeros((hp, cp), jnp.float32).at[:h, :c].set(
        w_out_pt.T.astype(jnp.float32))
    b_outp = jnp.full((1, cp), -1e30, jnp.float32).at[:, :c].set(
        b_out.astype(jnp.float32))
    return w_ih3, bias3, w_out, b_outp


def classifier_forward(x, w_ih3, bias3, w_out, b_outp, n_classes,
                       batch_tile=256):
    """x: (B, E) -> log-probs (B, n_classes)."""
    b, e = x.shape
    ep = w_ih3.shape[0]
    hp = w_out.shape[0]
    cp = w_out.shape[1]

    # Pad batch to the f32 sublane granularity (8); tile it if it is large.
    bp = _round_up(b, 8)
    tb = bp if bp <= batch_tile else batch_tile
    bp = _round_up(bp, tb)
    grid = (bp // tb,)

    # Zero-padded, lane/sublane-dense input (also performs PyTorch's .float()).
    x_p = jnp.zeros((bp, ep), jnp.float32).at[:b, :e].set(
        x.astype(jnp.float32))

    flops = 2 * bp * ep * 3 * hp + 2 * bp * hp * cp
    transcendentals = bp * (4 * hp + cp)       # 3 gate tanh + tanh(c1) + softmax exp
    bytes_accessed = 4 * (x_p.size + w_ih3.size + bias3.size + w_out.size
                          + b_outp.size + bp * cp)

    out = pl.pallas_call(
        classifier_kernel,
        out_shape=jax.ShapeDtypeStruct((bp, cp), jnp.float32),
        grid_spec=pltpu.PrefetchScalarGridSpec(
            num_scalar_prefetch=0,
            grid=grid,
            in_specs=[
                pl.BlockSpec((tb, ep), lambda i: (i, 0)),
                pl.BlockSpec((ep, 3 * hp), lambda i: (0, 0)),
                pl.BlockSpec((1, 3 * hp), lambda i: (0, 0)),
                pl.BlockSpec((hp, cp), lambda i: (0, 0)),
                pl.BlockSpec((1, cp), lambda i: (0, 0)),
            ],
            out_specs=pl.BlockSpec((tb, cp), lambda i: (i, 0)),
        ),
        compiler_params=pltpu.CompilerParams(
            dimension_semantics=("parallel",)),
        cost_estimate=pl.CostEstimate(
            flops=flops,
            transcendentals=transcendentals,
            bytes_accessed=bytes_accessed),
    )(x_p, w_ih3, bias3, w_out, b_outp)

    return out[:b, :n_classes]


def init_pytorch_params(key, embed_size, hidden_size, n_classes):
    """Deterministic synthetic parameters in PyTorch layout."""
    k1, k2, k3, k4, k5 = jax.random.split(key, 5)
    scale = 1.0 / jnp.sqrt(hidden_size)
    w_ih_pt = jax.random.uniform(k1, (4 * hidden_size, embed_size),
                                 jnp.float32, -scale, scale)
    b_ih = jax.random.uniform(k2, (4 * hidden_size,), jnp.float32, -scale, scale)
    b_hh = jax.random.uniform(k3, (4 * hidden_size,), jnp.float32, -scale, scale)
    w_out_pt = jax.random.uniform(k4, (n_classes, hidden_size),
                                  jnp.float32, -scale, scale)
    b_out = jax.random.uniform(k5, (n_classes,), jnp.float32, -scale, scale)
    return w_ih_pt, b_ih, b_hh, w_out_pt, b_out


def reference_forward(x, w_ih_pt, b_ih, b_hh, w_out_pt, b_out):
    """Plain-JAX reference matching the PyTorch forward (seq_len=1, zero state)."""
    h = w_ih_pt.shape[0] // 4
    gates = x.astype(jnp.float32) @ w_ih_pt.T + b_ih + b_hh
    i_g = jax.nn.sigmoid(gates[:, 0 * h:1 * h])
    g_g = jnp.tanh(gates[:, 2 * h:3 * h])
    o_g = jax.nn.sigmoid(gates[:, 3 * h:4 * h])
    c1 = i_g * g_g
    h1 = o_g * jnp.tanh(c1)
    logits = h1 @ w_out_pt.T + b_out
    return jax.nn.log_softmax(logits, axis=-1)


if __name__ == "__main__":
    batch = 2
    embed_size = 16
    hidden_size = 32
    n_classes = 8

    key = jax.random.PRNGKey(0)
    kx, kp = jax.random.split(key)
    x = jax.random.normal(kx, (batch, embed_size), jnp.float32)

    pt_params = init_pytorch_params(kp, embed_size, hidden_size, n_classes)
    kernel_params = prepare_params(*pt_params)

    log_probs = classifier_forward(x, *kernel_params, n_classes=n_classes)
    jax.block_until_ready(log_probs)

    # Sanity checks: shape, normalization, and agreement with the JAX reference.
    ref = reference_forward(x, *pt_params)
    assert log_probs.shape == (batch, n_classes)
    assert jnp.allclose(jnp.sum(jnp.exp(log_probs), axis=1), 1.0, atol=1e-5)
    assert jnp.allclose(log_probs, ref, atol=1e-4, rtol=1e-4)

    print("KERNEL_OK")
</pallas_src>

<mosaic_0001>
module attributes {stable_mosaic.version = 11 : i64} {
  func.func @classifier_kernel(%arg0: i32, %arg1: memref<8x128xf32, #tpu.memory_space<vmem>>, %arg2: memref<128x384xf32, #tpu.memory_space<vmem>>, %arg3: memref<1x384xf32, #tpu.memory_space<vmem>>, %arg4: memref<128x128xf32, #tpu.memory_space<vmem>>, %arg5: memref<1x128xf32, #tpu.memory_space<vmem>>, %arg6: memref<8x128xf32, #tpu.memory_space<vmem>>) attributes {dimension_semantics = [#tpu.dimension_semantics<parallel>], iteration_bounds = array<i64: 1>, scalar_prefetch = 0 : i64, scratch_operands = 0 : i64, tpu.core_type = #tpu.core_type<tc>, window_params = [{transform_indices = @transform_0, window_bounds = array<i64: 8, 128>}, {pipeline_mode = #tpu.pipeline_mode<synchronous>, transform_indices = @transform_1, window_bounds = array<i64: 128, 384>}, {pipeline_mode = #tpu.pipeline_mode<synchronous>, transform_indices = @transform_2, window_bounds = array<i64: 1, 384>}, {pipeline_mode = #tpu.pipeline_mode<synchronous>, transform_indices = @transform_3, window_bounds = array<i64: 128, 128>}, {pipeline_mode = #tpu.pipeline_mode<synchronous>, transform_indices = @transform_4, window_bounds = array<i64: 1, 128>}, {transform_indices = @transform_5, window_bounds = array<i64: 8, 128>}]} {
    %c0 = arith.constant 0 : index
    %c0_0 = arith.constant 0 : index
    %0 = vector.load %arg1[%c0, %c0_0] : memref<8x128xf32, #tpu.memory_space<vmem>>, vector<8x128xf32>
    %c0_1 = arith.constant 0 : index
    %c0_2 = arith.constant 0 : index
    %1 = vector.load %arg2[%c0_1, %c0_2] : memref<128x384xf32, #tpu.memory_space<vmem>>, vector<128x384xf32>
    %cst = arith.constant dense<0.000000e+00> : vector<8x384xf32>
    %2 = tpu.matmul %0, %1, %cst {dimension_numbers = #tpu.dot_dimension_numbers<[1], [0], [0], [1], [0, 0, 1, 1], [], []>} : vector<8x128xf32>, vector<128x384xf32>, vector<8x384xf32> -> vector<8x384xf32>
    %c0_3 = arith.constant 0 : index
    %c0_4 = arith.constant 0 : index
    %3 = vector.load %arg3[%c0_3, %c0_4] : memref<1x384xf32, #tpu.memory_space<vmem>>, vector<1x384xf32>
    %4 = vector.broadcast %3 : vector<1x384xf32> to vector<8x384xf32>
    %5 = arith.addf %2, %4 : vector<8x384xf32>
    %6 = vector.extract_strided_slice %5 {offsets = [0, 0], sizes = [8, 128], strides = [1, 1]} : vector<8x384xf32> to vector<8x128xf32>
    %cst_5 = arith.constant 5.000000e-01 : f32
    %7 = vector.broadcast %cst_5 : f32 to vector<8x128xf32>
    %8 = arith.mulf %7, %6 : vector<8x128xf32>
    %9 = math.tanh %8 : vector<8x128xf32>
    %cst_6 = arith.constant 5.000000e-01 : f32
    %10 = vector.broadcast %cst_6 : f32 to vector<8x128xf32>
    %11 = arith.mulf %10, %9 : vector<8x128xf32>
    %cst_7 = arith.constant 5.000000e-01 : f32
    %12 = vector.broadcast %cst_7 : f32 to vector<8x128xf32>
    %13 = arith.addf %11, %12 : vector<8x128xf32>
    %14 = vector.extract_strided_slice %5 {offsets = [0, 128], sizes = [8, 128], strides = [1, 1]} : vector<8x384xf32> to vector<8x128xf32>
    %15 = math.tanh %14 : vector<8x128xf32>
    %16 = vector.extract_strided_slice %5 {offsets = [0, 256], sizes = [8, 128], strides = [1, 1]} : vector<8x384xf32> to vector<8x128xf32>
    %cst_8 = arith.constant 5.000000e-01 : f32
    %17 = vector.broadcast %cst_8 : f32 to vector<8x128xf32>
    %18 = arith.mulf %17, %16 : vector<8x128xf32>
    %19 = math.tanh %18 : vector<8x128xf32>
    %cst_9 = arith.constant 5.000000e-01 : f32
    %20 = vector.broadcast %cst_9 : f32 to vector<8x128xf32>
    %21 = arith.mulf %20, %19 : vector<8x128xf32>
    %cst_10 = arith.constant 5.000000e-01 : f32
    %22 = vector.broadcast %cst_10 : f32 to vector<8x128xf32>
    %23 = arith.addf %21, %22 : vector<8x128xf32>
    %24 = arith.mulf %13, %15 : vector<8x128xf32>
    %25 = math.tanh %24 : vector<8x128xf32>
    %26 = arith.mulf %23, %25 : vector<8x128xf32>
    %c0_11 = arith.constant 0 : index
    %c0_12 = arith.constant 0 : index
    %27 = vector.load %arg4[%c0_11, %c0_12] : memref<128x128xf32, #tpu.memory_space<vmem>>, vector<128x128xf32>
    %cst_13 = arith.constant dense<0.000000e+00> : vector<8x128xf32>
    %28 = tpu.matmul %26, %27, %cst_13 {dimension_numbers = #tpu.dot_dimension_numbers<[1], [0], [0], [1], [0, 0, 1, 1], [], []>} : vector<8x128xf32>, vector<128x128xf32>, vector<8x128xf32> -> vector<8x128xf32>
    %c0_14 = arith.constant 0 : index
    %c0_15 = arith.constant 0 : index
    %29 = vector.load %arg5[%c0_14, %c0_15] : memref<1x128xf32, #tpu.memory_space<vmem>>, vector<1x128xf32>
    %30 = vector.broadcast %29 : vector<1x128xf32> to vector<8x128xf32>
    %31 = arith.addf %28, %30 : vector<8x128xf32>
    %cst_16 = arith.constant dense<0xFF800000> : vector<8xf32>
    %32 = vector.multi_reduction <maximumf>, %31, %cst_16 [1] : vector<8x128xf32> to vector<8xf32>
    %33 = vector.shape_cast %32 : vector<8xf32> to vector<8x1xf32>
    %34 = vector.broadcast %33 : vector<8x1xf32> to vector<8x128xf32>
    %35 = arith.subf %31, %34 : vector<8x128xf32>
    %36 = math.exp %35 : vector<8x128xf32>
    %cst_17 = arith.constant dense<0.000000e+00> : vector<8xf32>
    %37 = vector.multi_reduction <add>, %36, %cst_17 [1] : vector<8x128xf32> to vector<8xf32>
    %38 = vector.shape_cast %37 : vector<8xf32> to vector<8x1xf32>
    %39 = math.log %38 : vector<8x1xf32>
    %40 = vector.broadcast %39 : vector<8x1xf32> to vector<8x128xf32>
    %41 = arith.subf %35, %40 : vector<8x128xf32>
    %c0_18 = arith.constant 0 : index
    %c0_19 = arith.constant 0 : index
    %42 = vector.load %arg6[%c0_18, %c0_19] : memref<8x128xf32, #tpu.memory_space<vmem>>, vector<8x128xf32>
    tpu.vector_store %arg6[%c0_18, %c0_19], %41 {strides = array<i32>} : memref<8x128xf32, #tpu.memory_space<vmem>>, vector<8x128xf32>,
    return
  }
  func.func @transform_0(%arg0: i32) -> (i32, i32) {
    %c0_i32 = arith.constant 0 : i32
    %c0_i32_0 = arith.constant 0 : i32
    return %arg0, %c0_i32 : i32, i32
  }
  func.func @transform_1(%arg0: i32) -> (i32, i32) {
    %c0_i32 = arith.constant 0 : i32
    %c0_i32_0 = arith.constant 0 : i32
    %c0_i32_1 = arith.constant 0 : i32
    return %c0_i32, %c0_i32_0 : i32, i32
  }
  func.func @transform_2(%arg0: i32) -> (i32, i32) {
    %c0_i32 = arith.constant 0 : i32
    %c0_i32_0 = arith.constant 0 : i32
    %c0_i32_1 = arith.constant 0 : i32
    return %c0_i32, %c0_i32_0 : i32, i32
  }
  func.func @transform_3(%arg0: i32) -> (i32, i32) {
    %c0_i32 = arith.constant 0 : i32
    %c0_i32_0 = arith.constant 0 : i32
    %c0_i32_1 = arith.constant 0 : i32
    return %c0_i32, %c0_i32_0 : i32, i32
  }
  func.func @transform_4(%arg0: i32) -> (i32, i32) {
    %c0_i32 = arith.constant 0 : i32
    %c0_i32_0 = arith.constant 0 : i32
    %c0_i32_1 = arith.constant 0 : i32
    return %c0_i32, %c0_i32_0 : i32, i32
  }
  func.func @transform_5(%arg0: i32) -> (i32, i32) {
    %c0_i32 = arith.constant 0 : i32
    %c0_i32_0 = arith.constant 0 : i32
    return %arg0, %c0_i32 : i32, i32
  }
}

</mosaic_0001>

<llo_original>
// kernel: tpu_custom_call.1
$region0: #{tpu_custom_call.1}
  #allocation0 [shape = 'u32[]', space=smem, size = 0x4, offset = 0x4, fixed_abs, tag = 'smem constant byte address 0x4 - core index']
  #allocation1 [shape = 'u32[72,128]{1,0:T(1,128)}', space=vmem, size = 0x9000, scoped, tag = 'internal scratch']
  %s0 = inlined_call_operand.hbm [shape: f32[8,128], index: 0, kind: input, shape index: {}]
  %s1 = inlined_call_operand.hbm [shape: f32[128,384], index: 1, kind: input, shape index: {}]
  %s2 = inlined_call_operand.hbm [shape: f32[1,384], index: 2, kind: input, shape index: {}]
  %s3 = inlined_call_operand.hbm [shape: f32[128,128], index: 3, kind: input, shape index: {}]
  %s4 = inlined_call_operand.vmem [shape: f32[1,128], index: 4, kind: input, shape index: {}]
  %s5 = inlined_call_operand.hbm [shape: f32[8,128], index: 5, kind: output, shape index: {}]
  %s6 = sld [smem:[#allocation0]]
  $region46: #{tpu_custom_call.1} parent=0
    _
  %s8 = ssub.s32 1, %s6
  %s9 = scalar_select 0, %s8, %s6
  $region1: #{tpu_custom_call.1} parent=0
    #allocation2 [shape = 'u8[4096]{0}', space=vmem, size = 0x1000, scoped, tag = 'input window, operand 0, single buffered']
    #allocation3 [shape = 's32[1]{0}', space=sflag, size = 0x4, scoped, tag = 'scoped memory for tpu_custom_call.1']
    #allocation4 [shape = 's32[1]{0}', space=sflag, size = 0x4, scoped, tag = 'scoped memory for tpu_custom_call.1']
    #allocation5 [shape = 'u8[196608]{0}', space=vmem, size = 0x30000, scoped, tag = 'input window, operand 1, single buffered']
    #allocation6 [shape = 's32[1]{0}', space=sflag, size = 0x4, scoped, tag = 'scoped memory for tpu_custom_call.1']
    #allocation7 [shape = 'u8[1536]{0}', space=vmem, size = 0x800, scoped, tag = 'input window, operand 2, single buffered']
    #allocation8 [shape = 'u8[65536]{0}', space=vmem, size = 0x10000, scoped, tag = 'input window, operand 3, single buffered']
    #allocation9 [shape = 's32[1]{0}', space=sflag, size = 0x4, scoped, tag = 'scoped memory for tpu_custom_call.1']
    #allocation10 [shape = 'u8[4096]{0}', space=vmem, size = 0x1000, scoped, tag = 'output window, operand 0, single buffered']
    %10 = vsyncpa [#allocation3], 0
    %11 = vsyncpa [#allocation6], 0
    %12 = vsyncpa [#allocation9], 0
    %13 = vsyncpa [#allocation4], 0
    // Predicated region
    $region2: #{tpu_custom_call.1} parent=1 // pred_check
      _
    $region3: #{tpu_custom_call.1} parent=1 // pred_check_branch
      %15 = sbr.rel (0) target = $region5
    $region4: #{tpu_custom_call.1} parent=1 // pred_region
      %17 = vsyncadd [#allocation3], 0
      %s19 = sshll.u32 %s0, 4
      %s20 = int_to_ptr.hbm [resolvable:$true] %s19
      %s21 = sshll.u32 [#allocation2], 4
      %s22 = int_to_ptr.vmem [resolvable:$true] %s21
      %24 = dma.hbm_to_vmem [thread:$0]  %s20, 128, %s22, [#allocation3]
    $region5: #{tpu_custom_call.1} parent=1 // pred_fallthru
      _
    // Predicated region
    $region6: #{tpu_custom_call.1} parent=1 // pred_check
      _
    $region7: #{tpu_custom_call.1} parent=1 // pred_check_branch
      %26 = sbr.rel (0) target = $region9
    $region8: #{tpu_custom_call.1} parent=1 // pred_region
      %28 = vsyncadd [#allocation6], 0
      %s29 = sshll.u32 %s1, 4
      %s30 = int_to_ptr.hbm [resolvable:$true] %s29
      %s31 = sshll.u32 [#allocation5], 4
      %s32 = int_to_ptr.vmem [resolvable:$true] %s31
      %37 = dma.hbm_to_vmem [thread:$0]  %s30, 6144, %s32, [#allocation6], 384, 384, 24
    $region9: #{tpu_custom_call.1} parent=1 // pred_fallthru
      _
    // Predicated region
    $region10: #{tpu_custom_call.1} parent=1 // pred_check
      _
    $region11: #{tpu_custom_call.1} parent=1 // pred_check_branch
      %39 = sbr.rel (0) target = $region13
    $region12: #{tpu_custom_call.1} parent=1 // pred_region
      %41 = vsyncadd [#allocation6], 0
      %s43 = sshll.u32 %s2, 4
      %s44 = int_to_ptr.hbm [resolvable:$true] %s43
      %s45 = sshll.u32 [#allocation7], 4
      %s46 = int_to_ptr.vmem [resolvable:$true] %s45
      %48 = dma.hbm_to_vmem [thread:$0]  %s44, 48, %s46, [#allocation6]
    $region13: #{tpu_custom_call.1} parent=1 // pred_fallthru
      _
    // Predicated region
    $region14: #{tpu_custom_call.1} parent=1 // pred_check
      _
    $region15: #{tpu_custom_call.1} parent=1 // pred_check_branch
      %50 = sbr.rel (0) target = $region17
    $region16: #{tpu_custom_call.1} parent=1 // pred_region
      %52 = vsyncadd [#allocation9], 0
      %s53 = sshll.u32 %s3, 4
      %s54 = int_to_ptr.hbm [resolvable:$true] %s53
      %s55 = sshll.u32 [#allocation8], 4
      %s56 = int_to_ptr.vmem [resolvable:$true] %s55
      %61 = dma.hbm_to_vmem [thread:$0]  %s54, 2048, %s56, [#allocation9], 128, 128, 8
    $region17: #{tpu_custom_call.1} parent=1 // pred_fallthru
      _
    // Predicated region
    $region18: #{tpu_custom_call.1} parent=1 // pred_check
      _
    $region19: #{tpu_custom_call.1} parent=1 // pred_check_branch
      %63 = sbr.rel (0) target = $region21
    $region20: #{tpu_custom_call.1} parent=1 // pred_region
      _
    $region21: #{tpu_custom_call.1} parent=1 // pred_fallthru
      _
    // Predicated region
    $region22: #{tpu_custom_call.1} parent=1 // pred_check
      _
    $region23: #{tpu_custom_call.1} parent=1 // pred_check_branch
      %65 = sbr.rel (0) target = $region25
    $region24: #{tpu_custom_call.1} parent=1 // pred_region
      %67 = dma.done [#allocation3], 128
    $region25: #{tpu_custom_call.1} parent=1 // pred_fallthru
      _
    // Predicated region
    $region26: #{tpu_custom_call.1} parent=1 // pred_check
      _
    $region27: #{tpu_custom_call.1} parent=1 // pred_check_branch
      %69 = sbr.rel (0) target = $region29
    $region28: #{tpu_custom_call.1} parent=1 // pred_region
      %71 = dma.done [#allocation6], 6144
    $region29: #{tpu_custom_call.1} parent=1 // pred_fallthru
      _
    // Predicated region
    $region30: #{tpu_custom_call.1} parent=1 // pred_check
      _
    $region31: #{tpu_custom_call.1} parent=1 // pred_check_branch
      %73 = sbr.rel (0) target = $region33
    $region32: #{tpu_custom_call.1} parent=1 // pred_region
      %75 = dma.done [#allocation6], 48
    $region33: #{tpu_custom_call.1} parent=1 // pred_fallthru
      _
    // Predicated region
    $region34: #{tpu_custom_call.1} parent=1 // pred_check
      _
    $region35: #{tpu_custom_call.1} parent=1 // pred_check_branch
      %77 = sbr.rel (0) target = $region37
    $region36: #{tpu_custom_call.1} parent=1 // pred_region
      %79 = dma.done [#allocation9], 2048
    $region37: #{tpu_custom_call.1} parent=1 // pred_fallthru
      _
    %v80 = vld [vmem:[#allocation2] sm:$0xff]
    %v81 = vld [vmem:[#allocation5] sm:$0xff]
    %v82 = vld [vmem:[#allocation5 + $0x8] sm:$0xff]
    %v83 = vld [vmem:[#allocation5 + $0x10] sm:$0xff]
    %v84 = vld [vmem:[#allocation5 + $0x18] sm:$0xff]
    %v85 = vld [vmem:[#allocation5 + $0x20] sm:$0xff]
    %v86 = vld [vmem:[#allocation5 + $0x28] sm:$0xff]
    %v87 = vld [vmem:[#allocation5 + $0x30] sm:$0xff]
    %v88 = vld [vmem:[#allocation5 + $0x38] sm:$0xff]
    %v89 = vld [vmem:[#allocation5 + $0x40] sm:$0xff]
    %v90 = vld [vmem:[#allocation5 + $0x48] sm:$0xff]
    %v91 = vld [vmem:[#allocation5 + $0x50] sm:$0xff]
    %v92 = vld [vmem:[#allocation5 + $0x58] sm:$0xff]
    %v93 = vld [vmem:[#allocation5 + $0x60] sm:$0xff]
    %v94 = vld [vmem:[#allocation5 + $0x68] sm:$0xff]
    %v95 = vld [vmem:[#allocation5 + $0x70] sm:$0xff]
    %v96 = vld [vmem:[#allocation5 + $0x78] sm:$0xff]
    %v97 = vld [vmem:[#allocation5 + $0x80] sm:$0xff]
    %v98 = vld [vmem:[#allocation5 + $0x88] sm:$0xff]
    %v99 = vld [vmem:[#allocation5 + $0x90] sm:$0xff]
    %v100 = vld [vmem:[#allocation5 + $0x98] sm:$0xff]
    %v101 = vld [vmem:[#allocation5 + $0xa0] sm:$0xff]
    %v102 = vld [vmem:[#allocation5 + $0xa8] sm:$0xff]
    %v103 = vld [vmem:[#allocation5 + $0xb0] sm:$0xff]
    %v104 = vld [vmem:[#allocation5 + $0xb8] sm:$0xff]
    %v105 = vld [vmem:[#allocation5 + $0xc0] sm:$0xff]
    %v106 = vld [vmem:[#allocation5 + $0xc8] sm:$0xff]
    %v107 = vld [vmem:[#allocation5 + $0xd0] sm:$0xff]
    %v108 = vld [vmem:[#allocation5 + $0xd8] sm:$0xff]
    %v109 = vld [vmem:[#allocation5 + $0xe0] sm:$0xff]
    %v110 = vld [vmem:[#allocation5 + $0xe8] sm:$0xff]
    %v111 = vld [vmem:[#allocation5 + $0xf0] sm:$0xff]
    %v112 = vld [vmem:[#allocation5 + $0xf8] sm:$0xff]
    %v113 = vld [vmem:[#allocation5 + $0x100] sm:$0xff]
    %v114 = vld [vmem:[#allocation5 + $0x108] sm:$0xff]
    %v115 = vld [vmem:[#allocation5 + $0x110] sm:$0xff]
    %v116 = vld [vmem:[#allocation5 + $0x118] sm:$0xff]
    %v117 = vld [vmem:[#allocation5 + $0x120] sm:$0xff]
    %v118 = vld [vmem:[#allocation5 + $0x128] sm:$0xff]
    %v119 = vld [vmem:[#allocation5 + $0x130] sm:$0xff]
    %v120 = vld [vmem:[#allocation5 + $0x138] sm:$0xff]
    %v121 = vld [vmem:[#allocation5 + $0x140] sm:$0xff]
    %v122 = vld [vmem:[#allocation5 + $0x148] sm:$0xff]
    %v123 = vld [vmem:[#allocation5 + $0x150] sm:$0xff]
    %v124 = vld [vmem:[#allocation5 + $0x158] sm:$0xff]
    %v125 = vld [vmem:[#allocation5 + $0x160] sm:$0xff]
    %v126 = vld [vmem:[#allocation5 + $0x168] sm:$0xff]
    %v127 = vld [vmem:[#allocation5 + $0x170] sm:$0xff]
    %v128 = vld [vmem:[#allocation5 + $0x178] sm:$0xff]
    %v129 = vld [vmem:[#allocation7] sm:$0x7]
    %v131 = vperm.slane %v129, 0
    %v132 = vperm.slane %v129, 1
    %v133 = vperm.slane %v129, 2
    %137 = vmatpush.msra.mxu0 %v126
    %138 = vmatpush.msra.mxu0 %v123
    %139 = vmatpush.msra.mxu0 %v120
    %140 = vmatpush.msra.mxu0 %v117
    %141 = vmatpush.msra.mxu0 %v114
    %142 = vmatpush.msra.mxu0 %v111
    %143 = vmatpush.msra.mxu0 %v108
    %144 = vmatpush.msra.mxu0 %v105
    %145 = vmatpush.msra.mxu0 %v102
    %146 = vmatpush.msra.mxu0 %v99
    %147 = vmatpush.msra.mxu0 %v96
    %148 = vmatpush.msra.mxu0 %v93
    %149 = vmatpush.msra.mxu0 %v90
    %150 = vmatpush.msra.mxu0 %v87
    %151 = vmatpush.msra.mxu0 %v84
    %152 = vmatpush.msra.mxu0 %v81
    %153 = vmatmul.f32.gmra.mxu0 %v80
    %v154 = vpop.f32.mrf.mxu0
    %v155 = vadd.f32 %v131, %v154
    %156 = vdwg.mxu0
    %157 = vmatpush.msra.mxu0 %v127
    %158 = vmatpush.msra.mxu0 %v124
    %159 = vmatpush.msra.mxu0 %v121
    %160 = vmatpush.msra.mxu0 %v118
    %161 = vmatpush.msra.mxu0 %v115
    %162 = vmatpush.msra.mxu0 %v112
    %163 = vmatpush.msra.mxu0 %v109
    %164 = vmatpush.msra.mxu0 %v106
    %165 = vmatpush.msra.mxu0 %v103
    %166 = vmatpush.msra.mxu0 %v100
    %167 = vmatpush.msra.mxu0 %v97
    %168 = vmatpush.msra.mxu0 %v94
    %169 = vmatpush.msra.mxu0 %v91
    %170 = vmatpush.msra.mxu0 %v88
    %171 = vmatpush.msra.mxu0 %v85
    %172 = vmatpush.msra.mxu0 %v82
    %173 = vmatmul.f32.gmra.mxu0 %v80
    %v174 = vpop.f32.mrf.mxu0
    %v175 = vadd.f32 %v132, %v174
    %176 = vdwg.mxu0
    %177 = vmatpush.msra.mxu0 %v128
    %178 = vmatpush.msra.mxu0 %v125
    %179 = vmatpush.msra.mxu0 %v122
    %180 = vmatpush.msra.mxu0 %v119
    %181 = vmatpush.msra.mxu0 %v116
    %182 = vmatpush.msra.mxu0 %v113
    %183 = vmatpush.msra.mxu0 %v110
    %184 = vmatpush.msra.mxu0 %v107
    %185 = vmatpush.msra.mxu0 %v104
    %186 = vmatpush.msra.mxu0 %v101
    %187 = vmatpush.msra.mxu0 %v98
    %188 = vmatpush.msra.mxu0 %v95
    %189 = vmatpush.msra.mxu0 %v92
    %190 = vmatpush.msra.mxu0 %v89
    %191 = vmatpush.msra.mxu0 %v86
    %192 = vmatpush.msra.mxu0 %v83
    %193 = vmatmul.f32.gmra.mxu0 %v80
    %v194 = vpop.f32.mrf.mxu0
    %v195 = vadd.f32 %v133, %v194
    %196 = vdwg.mxu0
    %v197 = vmul.f32 %v155, 0.5
    %v198 = vtanh.pop %v197
    %v199 = vmul.f32 %v198, 0.5
    %v200 = vadd.f32 %v199, 0.5
    %v201 = vtanh.pop %v175
    %v202 = vmul.f32 %v195, 0.5
    %v203 = vtanh.pop %v202
    %v204 = vmul.f32 %v203, 0.5
    %v205 = vadd.f32 %v204, 0.5
    %v206 = vmul.f32 %v200, %v201
    %v207 = vtanh.pop %v206
    %v208 = vmul.f32 %v205, %v207
    %v209 = vld [vmem:[#allocation8] sm:$0xff]
    %v210 = vld [vmem:[#allocation8 + $0x8] sm:$0xff]
    %v211 = vld [vmem:[#allocation8 + $0x10] sm:$0xff]
    %v212 = vld [vmem:[#allocation8 + $0x18] sm:$0xff]
    %v213 = vld [vmem:[#allocation8 + $0x20] sm:$0xff]
    %v214 = vld [vmem:[#allocation8 + $0x28] sm:$0xff]
    %v215 = vld [vmem:[#allocation8 + $0x30] sm:$0xff]
    %v216 = vld [vmem:[#allocation8 + $0x38] sm:$0xff]
    %v217 = vld [vmem:[#allocation8 + $0x40] sm:$0xff]
    %v218 = vld [vmem:[#allocation8 + $0x48] sm:$0xff]
    %v219 = vld [vmem:[#allocation8 + $0x50] sm:$0xff]
    %v220 = vld [vmem:[#allocation8 + $0x58] sm:$0xff]
    %v221 = vld [vmem:[#allocation8 + $0x60] sm:$0xff]
    %v222 = vld [vmem:[#allocation8 + $0x68] sm:$0xff]
    %v223 = vld [vmem:[#allocation8 + $0x70] sm:$0xff]
    %v224 = vld [vmem:[#allocation8 + $0x78] sm:$0xff]
    %v225 = vld [vmem:[%s4] sm:$0x1]
    %v227 = vperm.slane %v225, 0
    %229 = vmatpush.msra.mxu0 %v224
    %230 = vmatpush.msra.mxu0 %v223
    %231 = vmatpush.msra.mxu0 %v222
    %232 = vmatpush.msra.mxu0 %v221
    %233 = vmatpush.msra.mxu0 %v220
    %234 = vmatpush.msra.mxu0 %v219
    %235 = vmatpush.msra.mxu0 %v218
    %236 = vmatpush.msra.mxu0 %v217
    %237 = vmatpush.msra.mxu0 %v216
    %238 = vmatpush.msra.mxu0 %v215
    %239 = vmatpush.msra.mxu0 %v214
    %240 = vmatpush.msra.mxu0 %v213
    %241 = vmatpush.msra.mxu0 %v212
    %242 = vmatpush.msra.mxu0 %v211
    %243 = vmatpush.msra.mxu0 %v210
    %244 = vmatpush.msra.mxu0 %v209
    %245 = vmatmul.f32.gmra.mxu0 %v208
    %v246 = vpop.f32.mrf.mxu0
    %v247 = vadd.f32 %v227, %v246
    %248 = vdwg.mxu0
    %249 = vmax.xlane.f32.xlu0 %v247
    %v250 = vpop.xlane.xlu0 %249
    %v251 = vsub.f32 %v247, %v250
    %v252 = vmul.f32 %v251, 1.442695
    %v253 = vpow.pop %v252
    %254 = vadd.xlane.f32.xlu0 %v253
    %v255 = vpop.xlane.xlu0 %254
    %v256 = vlog2.pop %v255
    %v257 = vmul.f32 %v256, 0.6931472
    %v258 = vsub.f32 %v251, %v257
    %259 = vst [vmem:[#allocation10] sm:$0xff] %v258
    // Predicated region
    $region38: #{tpu_custom_call.1} parent=1 // pred_check
      _
    $region39: #{tpu_custom_call.1} parent=1 // pred_check_branch
      %261 = sbr.rel (0) target = $region41
    $region40: #{tpu_custom_call.1} parent=1 // pred_region
      %263 = vsyncadd [#allocation4], 0
      %s265 = sshll.u32 [#allocation10], 4
      %s266 = int_to_ptr.vmem [resolvable:$true] %s265
      %s267 = sshll.u32 %s5, 4
      %s268 = int_to_ptr.hbm [resolvable:$true] %s267
      %270 = dma.vmem_to_hbm [thread:$0]  %s266, 128, %s268, [#allocation4]
    $region41: #{tpu_custom_call.1} parent=1 // pred_fallthru
      _
    // Predicated region
    $region42: #{tpu_custom_call.1} parent=1 // pred_check
      _
    $region43: #{tpu_custom_call.1} parent=1 // pred_check_branch
      %272 = sbr.rel (0) target = $region45
    $region44: #{tpu_custom_call.1} parent=1 // pred_region
      %274 = dma.done [#allocation4], 128
    $region45: #{tpu_custom_call.1} parent=1 // pred_fallthru
      _
    %275 = vsyncpa [#allocation3], 1
    %276 = vsyncpa [#allocation6], 1
    %277 = vsyncpa [#allocation9], 1
    %278 = vsyncpa [#allocation4], 1

</llo_original>
